<compile_context>
chip_gen: v5e
topology: v5e:2x2
jax: 0.10.0
libtpu: 0.0.40
codegen_flags: <defaults>
</compile_context>

<pallas_src>
import functools

import jax
import jax.numpy as jnp
from jax.experimental import pallas as pl
from jax.experimental.pallas import tpu as pltpu

HIDDEN_SIZES = (128, 256)
W3_PAD = 128  # last-layer weight padded once (at prep time) to a clean MXU width


def _pick_tb(batch):
    """Static batch-tile choice (trace-time Python int)."""
    if batch >= 1024:
        return 256                      # big replay batches: fewer, bigger steps
    if batch > 128:
        return 128                      # >=2 grid steps -> both v7x TensorCores
    return max(8, ((batch + 7) // 8) * 8)  # tiny inference batch: single tile


def dqn_kernel(x_ref, w1_ref, b1_ref, w2_ref, b2_ref, w3_ref, b3_ref, o_ref,
               *, out_dim):
    # ---- Layer 1 (K = 4): VPU broadcast-FMAs in f32 (exact, skips the MXU) ----
    x = x_ref[...]                          # (TB, in_dim) f32
    h1 = b1_ref[...]                        # (1, H1) f32, broadcasts up
    for k in range(x_ref.shape[1]):         # in_dim is tiny & static -> unrolled
        h1 = h1 + x[:, k:k + 1] * w1_ref[k:k + 1, :]
    h1 = jnp.maximum(h1, 0.0)

    # ---- Layers 2/3: bf16 MXU matmuls, f32 accumulation ----
    h2 = jnp.dot(h1.astype(jnp.bfloat16), w2_ref[...],
                 preferred_element_type=jnp.float32) + b2_ref[...]
    h2 = jnp.maximum(h2, 0.0)
    out = jnp.dot(h2.astype(jnp.bfloat16), w3_ref[...],
                  preferred_element_type=jnp.float32)
    # Keep only the real action columns; bias added after the slice.
    o_ref[...] = (out[:, :out_dim] + b3_ref[...]).astype(o_ref.dtype)


def prepare_dqn_params(w1, b1, w2, b2, w3, b3):
    """One-time parameter prep (re-run only after an optimizer step).

    Weights stored as [in, out] (transpose of nn.Linear.weight). Layer-1 weight
    stays f32 (VPU path); layers 2/3 are bf16 for the MXU; w3 is zero-padded to
    a clean 128-lane width. Biases are f32 row vectors.
    """
    out_dim = w3.shape[1]
    return (
        jnp.asarray(w1, jnp.float32),
        jnp.asarray(b1, jnp.float32).reshape(1, -1),
        jnp.asarray(w2, jnp.bfloat16),
        jnp.asarray(b2, jnp.float32).reshape(1, -1),
        jnp.pad(jnp.asarray(w3, jnp.bfloat16), ((0, 0), (0, W3_PAD - out_dim))),
        jnp.asarray(b3, jnp.float32).reshape(1, -1),
    )


@jax.jit
def dqn_forward(x, params):
    w1, b1, w2, b2, w3p, b3 = params
    B, in_dim = x.shape
    h1_dim = w1.shape[1]
    h2_dim = w2.shape[1]
    out_dim = b3.shape[1]
    w3_pad = w3p.shape[1]

    tb = _pick_tb(B)
    grid = (pl.cdiv(B, tb),)

    flops = 2 * B * (in_dim * h1_dim + h1_dim * h2_dim + h2_dim * w3_pad)
    bytes_accessed = (
        x.size * 4
        + w1.size * 4 + b1.size * 4
        + w2.size * 2 + b2.size * 4
        + w3p.size * 2 + b3.size * 4
        + B * out_dim * 4
    )

    return pl.pallas_call(
        functools.partial(dqn_kernel, out_dim=out_dim),
        out_shape=jax.ShapeDtypeStruct((B, out_dim), jnp.float32),
        grid_spec=pltpu.PrefetchScalarGridSpec(
            num_scalar_prefetch=0,
            grid=grid,
            in_specs=[
                # x: tiled along batch only
                pl.BlockSpec((tb, in_dim), lambda i: (i, 0)),
                # weights / biases: constant index_map -> VMEM-resident
                pl.BlockSpec((in_dim, h1_dim), lambda i: (0, 0)),
                pl.BlockSpec((1, h1_dim), lambda i: (0, 0)),
                pl.BlockSpec((h1_dim, h2_dim), lambda i: (0, 0)),
                pl.BlockSpec((1, h2_dim), lambda i: (0, 0)),
                pl.BlockSpec((h2_dim, w3_pad), lambda i: (0, 0)),
                pl.BlockSpec((1, out_dim), lambda i: (0, 0)),
            ],
            out_specs=pl.BlockSpec((tb, out_dim), lambda i: (i, 0)),
        ),
        compiler_params=pltpu.CompilerParams(
            dimension_semantics=("parallel",),
        ),
        cost_estimate=pl.CostEstimate(
            flops=flops, transcendentals=0, bytes_accessed=bytes_accessed
        ),
    )(x, w1, b1, w2, b2, w3p, b3)


def init_linear_params(key, in_features, out_features):
    """Deterministic init mimicking nn.Linear's U(-1/sqrt(in), 1/sqrt(in))."""
    kw, kb = jax.random.split(key)
    bound = 1.0 / jnp.sqrt(jnp.float32(in_features))
    # Stored as [in, out] so the kernel computes x @ W (== PyTorch x @ weight.T).
    w = jax.random.uniform(kw, (in_features, out_features), jnp.float32,
                           minval=-bound, maxval=bound)
    b = jax.random.uniform(kb, (out_features,), jnp.float32,
                           minval=-bound, maxval=bound)
    return w, b


if __name__ == "__main__":
    input_dim = 4     # CartPole observation dim
    output_dim = 2    # CartPole action dim
    batch = 8

    key = jax.random.PRNGKey(0)
    k_x, k1, k2, k3 = jax.random.split(key, 4)

    x = jax.random.normal(k_x, (batch, input_dim), jnp.float32)
    w1, b1 = init_linear_params(k1, input_dim, HIDDEN_SIZES[0])
    w2, b2 = init_linear_params(k2, HIDDEN_SIZES[0], HIDDEN_SIZES[1])
    w3, b3 = init_linear_params(k3, HIDDEN_SIZES[1], output_dim)

    params = prepare_dqn_params(w1, b1, w2, b2, w3, b3)

    out = dqn_forward(x, params)
    out = jax.block_until_ready(out)

    # Pure-JAX reference mirroring the kernel math: layer 1 in f32, layers 2/3
    # with bf16 inputs and f32 accumulation.
    def bf(a):
        return a.astype(jnp.bfloat16).astype(jnp.float32)

    h1 = jnp.maximum(x @ w1 + b1[None, :], 0.0)
    h2 = jnp.maximum(bf(h1) @ bf(w2) + b2[None, :], 0.0)
    ref = bf(h2) @ bf(w3) + b3[None, :]

    assert out.shape == (batch, output_dim), out.shape
    assert jnp.allclose(out, ref, atol=2e-2, rtol=2e-2), (
        f"max abs err {jnp.max(jnp.abs(out - ref))}"
    )

    print("KERNEL_OK")
</pallas_src>

<mosaic_0001>
module attributes {stable_mosaic.version = 11 : i64} {
  func.func @dqn_kernel(%arg0: i32, %arg1: memref<8x4xf32, #tpu.memory_space<vmem>>, %arg2: memref<4x128xf32, #tpu.memory_space<vmem>>, %arg3: memref<1x128xf32, #tpu.memory_space<vmem>>, %arg4: memref<128x256xbf16, #tpu.memory_space<vmem>>, %arg5: memref<1x256xf32, #tpu.memory_space<vmem>>, %arg6: memref<256x128xbf16, #tpu.memory_space<vmem>>, %arg7: memref<1x2xf32, #tpu.memory_space<vmem>>, %arg8: memref<8x2xf32, #tpu.memory_space<vmem>>) attributes {dimension_semantics = [#tpu.dimension_semantics<parallel>], iteration_bounds = array<i64: 1>, scalar_prefetch = 0 : i64, scratch_operands = 0 : i64, tpu.core_type = #tpu.core_type<tc>, window_params = [{transform_indices = @transform_0, window_bounds = array<i64: 8, 4>}, {pipeline_mode = #tpu.pipeline_mode<synchronous>, transform_indices = @transform_1, window_bounds = array<i64: 4, 128>}, {pipeline_mode = #tpu.pipeline_mode<synchronous>, transform_indices = @transform_2, window_bounds = array<i64: 1, 128>}, {pipeline_mode = #tpu.pipeline_mode<synchronous>, transform_indices = @transform_3, window_bounds = array<i64: 128, 256>}, {pipeline_mode = #tpu.pipeline_mode<synchronous>, transform_indices = @transform_4, window_bounds = array<i64: 1, 256>}, {pipeline_mode = #tpu.pipeline_mode<synchronous>, transform_indices = @transform_5, window_bounds = array<i64: 256, 128>}, {pipeline_mode = #tpu.pipeline_mode<synchronous>, transform_indices = @transform_6, window_bounds = array<i64: 1, 2>}, {transform_indices = @transform_7, window_bounds = array<i64: 8, 2>}]} {
    %c0 = arith.constant 0 : index
    %c0_0 = arith.constant 0 : index
    %0 = vector.load %arg1[%c0, %c0_0] : memref<8x4xf32, #tpu.memory_space<vmem>>, vector<8x4xf32>
    %c0_1 = arith.constant 0 : index
    %c0_2 = arith.constant 0 : index
    %1 = vector.load %arg3[%c0_1, %c0_2] : memref<1x128xf32, #tpu.memory_space<vmem>>, vector<1x128xf32>
    %2 = vector.extract_strided_slice %0 {offsets = [0, 0], sizes = [8, 1], strides = [1, 1]} : vector<8x4xf32> to vector<8x1xf32>
    %c0_3 = arith.constant 0 : index
    %c0_4 = arith.constant 0 : index
    %3 = vector.load %arg2[%c0_3, %c0_4] : memref<4x128xf32, #tpu.memory_space<vmem>>, vector<1x128xf32>
    %4 = vector.broadcast %2 : vector<8x1xf32> to vector<8x128xf32>
    %5 = vector.broadcast %3 : vector<1x128xf32> to vector<8x128xf32>
    %6 = arith.mulf %4, %5 : vector<8x128xf32>
    %7 = vector.broadcast %1 : vector<1x128xf32> to vector<8x128xf32>
    %8 = arith.addf %7, %6 : vector<8x128xf32>
    %9 = vector.extract_strided_slice %0 {offsets = [0, 1], sizes = [8, 1], strides = [1, 1]} : vector<8x4xf32> to vector<8x1xf32>
    %c1 = arith.constant 1 : index
    %c0_5 = arith.constant 0 : index
    %10 = vector.load %arg2[%c1, %c0_5] : memref<4x128xf32, #tpu.memory_space<vmem>>, vector<1x128xf32>
    %11 = vector.broadcast %9 : vector<8x1xf32> to vector<8x128xf32>
    %12 = vector.broadcast %10 : vector<1x128xf32> to vector<8x128xf32>
    %13 = arith.mulf %11, %12 : vector<8x128xf32>
    %14 = arith.addf %8, %13 : vector<8x128xf32>
    %15 = vector.extract_strided_slice %0 {offsets = [0, 2], sizes = [8, 1], strides = [1, 1]} : vector<8x4xf32> to vector<8x1xf32>
    %c2 = arith.constant 2 : index
    %c0_6 = arith.constant 0 : index
    %16 = vector.load %arg2[%c2, %c0_6] : memref<4x128xf32, #tpu.memory_space<vmem>>, vector<1x128xf32>
    %17 = vector.broadcast %15 : vector<8x1xf32> to vector<8x128xf32>
    %18 = vector.broadcast %16 : vector<1x128xf32> to vector<8x128xf32>
    %19 = arith.mulf %17, %18 : vector<8x128xf32>
    %20 = arith.addf %14, %19 : vector<8x128xf32>
    %21 = vector.extract_strided_slice %0 {offsets = [0, 3], sizes = [8, 1], strides = [1, 1]} : vector<8x4xf32> to vector<8x1xf32>
    %c3 = arith.constant 3 : index
    %c0_7 = arith.constant 0 : index
    %22 = vector.load %arg2[%c3, %c0_7] : memref<4x128xf32, #tpu.memory_space<vmem>>, vector<1x128xf32>
    %23 = vector.broadcast %21 : vector<8x1xf32> to vector<8x128xf32>
    %24 = vector.broadcast %22 : vector<1x128xf32> to vector<8x128xf32>
    %25 = arith.mulf %23, %24 : vector<8x128xf32>
    %26 = arith.addf %20, %25 : vector<8x128xf32>
    %cst = arith.constant 0.000000e+00 : f32
    %27 = vector.broadcast %cst : f32 to vector<8x128xf32>
    %28 = arith.maximumf %26, %27 : vector<8x128xf32>
    %29 = arith.truncf %28 : vector<8x128xf32> to vector<8x128xbf16>
    %c0_8 = arith.constant 0 : index
    %c0_9 = arith.constant 0 : index
    %30 = vector.load %arg4[%c0_8, %c0_9] : memref<128x256xbf16, #tpu.memory_space<vmem>>, vector<128x256xbf16>
    %cst_10 = arith.constant dense<0.000000e+00> : vector<8x256xf32>
    %31 = tpu.matmul %29, %30, %cst_10 {dimension_numbers = #tpu.dot_dimension_numbers<[1], [0], [0], [1], [0, 0, 1, 1], [], []>} : vector<8x128xbf16>, vector<128x256xbf16>, vector<8x256xf32> -> vector<8x256xf32>
    %c0_11 = arith.constant 0 : index
    %c0_12 = arith.constant 0 : index
    %32 = vector.load %arg5[%c0_11, %c0_12] : memref<1x256xf32, #tpu.memory_space<vmem>>, vector<1x256xf32>
    %33 = vector.broadcast %32 : vector<1x256xf32> to vector<8x256xf32>
    %34 = arith.addf %31, %33 : vector<8x256xf32>
    %cst_13 = arith.constant 0.000000e+00 : f32
    %35 = vector.broadcast %cst_13 : f32 to vector<8x256xf32>
    %36 = arith.maximumf %34, %35 : vector<8x256xf32>
    %37 = arith.truncf %36 : vector<8x256xf32> to vector<8x256xbf16>
    %c0_14 = arith.constant 0 : index
    %c0_15 = arith.constant 0 : index
    %38 = vector.load %arg6[%c0_14, %c0_15] : memref<256x128xbf16, #tpu.memory_space<vmem>>, vector<256x128xbf16>
    %cst_16 = arith.constant dense<0.000000e+00> : vector<8x128xf32>
    %39 = tpu.matmul %37, %38, %cst_16 {dimension_numbers = #tpu.dot_dimension_numbers<[1], [0], [0], [1], [0, 0, 1, 1], [], []>} : vector<8x256xbf16>, vector<256x128xbf16>, vector<8x128xf32> -> vector<8x128xf32>
    %40 = vector.extract_strided_slice %39 {offsets = [0, 0], sizes = [8, 2], strides = [1, 1]} : vector<8x128xf32> to vector<8x2xf32>
    %c0_17 = arith.constant 0 : index
    %c0_18 = arith.constant 0 : index
    %41 = vector.load %arg7[%c0_17, %c0_18] : memref<1x2xf32, #tpu.memory_space<vmem>>, vector<1x2xf32>
    %42 = vector.broadcast %41 : vector<1x2xf32> to vector<8x2xf32>
    %43 = arith.addf %40, %42 : vector<8x2xf32>
    %c0_19 = arith.constant 0 : index
    %c0_20 = arith.constant 0 : index
    %44 = vector.load %arg8[%c0_19, %c0_20] : memref<8x2xf32, #tpu.memory_space<vmem>>, vector<8x2xf32>
    tpu.vector_store %arg8[%c0_19, %c0_20], %43 {strides = array<i32>} : memref<8x2xf32, #tpu.memory_space<vmem>>, vector<8x2xf32>,
    return
  }
  func.func @transform_0(%arg0: i32) -> (i32, i32) {
    %c0_i32 = arith.constant 0 : i32
    %c0_i32_0 = arith.constant 0 : i32
    return %arg0, %c0_i32 : i32, i32
  }
  func.func @transform_1(%arg0: i32) -> (i32, i32) {
    %c0_i32 = arith.constant 0 : i32
    %c0_i32_0 = arith.constant 0 : i32
    %c0_i32_1 = arith.constant 0 : i32
    return %c0_i32, %c0_i32_0 : i32, i32
  }
  func.func @transform_2(%arg0: i32) -> (i32, i32) {
    %c0_i32 = arith.constant 0 : i32
    %c0_i32_0 = arith.constant 0 : i32
    %c0_i32_1 = arith.constant 0 : i32
    return %c0_i32, %c0_i32_0 : i32, i32
  }
  func.func @transform_3(%arg0: i32) -> (i32, i32) {
    %c0_i32 = arith.constant 0 : i32
    %c0_i32_0 = arith.constant 0 : i32
    %c0_i32_1 = arith.constant 0 : i32
    return %c0_i32, %c0_i32_0 : i32, i32
  }
  func.func @transform_4(%arg0: i32) -> (i32, i32) {
    %c0_i32 = arith.constant 0 : i32
    %c0_i32_0 = arith.constant 0 : i32
    %c0_i32_1 = arith.constant 0 : i32
    return %c0_i32, %c0_i32_0 : i32, i32
  }
  func.func @transform_5(%arg0: i32) -> (i32, i32) {
    %c0_i32 = arith.constant 0 : i32
    %c0_i32_0 = arith.constant 0 : i32
    %c0_i32_1 = arith.constant 0 : i32
    return %c0_i32, %c0_i32_0 : i32, i32
  }
  func.func @transform_6(%arg0: i32) -> (i32, i32) {
    %c0_i32 = arith.constant 0 : i32
    %c0_i32_0 = arith.constant 0 : i32
    %c0_i32_1 = arith.constant 0 : i32
    return %c0_i32, %c0_i32_0 : i32, i32
  }
  func.func @transform_7(%arg0: i32) -> (i32, i32) {
    %c0_i32 = arith.constant 0 : i32
    %c0_i32_0 = arith.constant 0 : i32
    return %arg0, %c0_i32 : i32, i32
  }
}

</mosaic_0001>

<llo_original>
// kernel: dqn_forward.1
$region0: #{dqn_forward.1}
  #allocation0 [shape = 'u32[]', space=smem, size = 0x4, offset = 0x4, fixed_abs, tag = 'smem constant byte address 0x4 - core index']
  #allocation1 [shape = 'u32[72,128]{1,0:T(1,128)}', space=vmem, size = 0x9000, scoped, tag = 'internal scratch']
  %s0 = inlined_call_operand.vmem [shape: f32[8,4], index: 0, kind: input, shape index: {}]
  %s1 = inlined_call_operand.vmem [shape: f32[4,128], index: 1, kind: input, shape index: {}]
  %s2 = inlined_call_operand.vmem [shape: f32[1,128], index: 2, kind: input, shape index: {}]
  %s3 = inlined_call_operand.hbm [shape: bf16[128,256], index: 3, kind: input, shape index: {}]
  %s4 = inlined_call_operand.vmem [shape: f32[1,256], index: 4, kind: input, shape index: {}]
  %s5 = inlined_call_operand.hbm [shape: bf16[256,128], index: 5, kind: input, shape index: {}]
  %s6 = inlined_call_operand.vmem [shape: f32[1,2], index: 6, kind: input, shape index: {}]
  %s7 = inlined_call_operand.vmem [shape: f32[8,2], index: 7, kind: output, shape index: {}]
  %s8 = sld [smem:[#allocation0]]
  $region46: #{dqn_forward.1} parent=0
    _
  %s10 = ssub.s32 1, %s8
  %s11 = scalar_select 0, %s10, %s8
  $region1: #{dqn_forward.1} parent=0
    #allocation2 [shape = 'u8[65536]{0}', space=vmem, size = 0x10000, scoped, tag = 'input window, operand 3, single buffered']
    #allocation3 [shape = 's32[1]{0}', space=sflag, size = 0x4, scoped, tag = 'scoped memory for dqn_forward.1']
    #allocation4 [shape = 'u8[65536]{0}', space=vmem, size = 0x10000, scoped, tag = 'input window, operand 5, single buffered']
    #allocation5 [shape = 's32[1]{0}', space=sflag, size = 0x4, scoped, tag = 'scoped memory for dqn_forward.1']
    %12 = vsyncpa [#allocation3], 0
    %13 = vsyncpa [#allocation5], 0
    // Predicated region
    $region2: #{dqn_forward.1} parent=1 // pred_check
      _
    $region3: #{dqn_forward.1} parent=1 // pred_check_branch
      %15 = sbr.rel (0) target = $region5
    $region4: #{dqn_forward.1} parent=1 // pred_region
      _
    $region5: #{dqn_forward.1} parent=1 // pred_fallthru
      _
    // Predicated region
    $region6: #{dqn_forward.1} parent=1 // pred_check
      _
    $region7: #{dqn_forward.1} parent=1 // pred_check_branch
      %17 = sbr.rel (0) target = $region9
    $region8: #{dqn_forward.1} parent=1 // pred_region
      _
    $region9: #{dqn_forward.1} parent=1 // pred_fallthru
      _
    // Predicated region
    $region10: #{dqn_forward.1} parent=1 // pred_check
      _
    $region11: #{dqn_forward.1} parent=1 // pred_check_branch
      %19 = sbr.rel (0) target = $region13
    $region12: #{dqn_forward.1} parent=1 // pred_region
      _
    $region13: #{dqn_forward.1} parent=1 // pred_fallthru
      _
    // Predicated region
    $region14: #{dqn_forward.1} parent=1 // pred_check
      _
    $region15: #{dqn_forward.1} parent=1 // pred_check_branch
      %21 = sbr.rel (0) target = $region17
    $region16: #{dqn_forward.1} parent=1 // pred_region
      %23 = vsyncadd [#allocation3], 0
      %s24 = sshll.u32 %s3, 4
      %s25 = int_to_ptr.hbm [resolvable:$true] %s24
      %s26 = sshll.u32 [#allocation2], 4
      %s27 = int_to_ptr.vmem [resolvable:$true] %s26
      %32 = dma.hbm_to_vmem [thread:$0]  %s25, 2048, %s27, [#allocation3], 128, 128, 8
    $region17: #{dqn_forward.1} parent=1 // pred_fallthru
      _
    // Predicated region
    $region18: #{dqn_forward.1} parent=1 // pred_check
      _
    $region19: #{dqn_forward.1} parent=1 // pred_check_branch
      %34 = sbr.rel (0) target = $region21
    $region20: #{dqn_forward.1} parent=1 // pred_region
      _
    $region21: #{dqn_forward.1} parent=1 // pred_fallthru
      _
    // Predicated region
    $region22: #{dqn_forward.1} parent=1 // pred_check
      _
    $region23: #{dqn_forward.1} parent=1 // pred_check_branch
      %36 = sbr.rel (0) target = $region25
    $region24: #{dqn_forward.1} parent=1 // pred_region
      %38 = vsyncadd [#allocation5], 0
      %s39 = sshll.u32 %s5, 4
      %s40 = int_to_ptr.hbm [resolvable:$true] %s39
      %s41 = sshll.u32 [#allocation4], 4
      %s42 = int_to_ptr.vmem [resolvable:$true] %s41
      %47 = dma.hbm_to_vmem [thread:$0]  %s40, 2048, %s42, [#allocation5], 64, 64, 4
    $region25: #{dqn_forward.1} parent=1 // pred_fallthru
      _
    // Predicated region
    $region26: #{dqn_forward.1} parent=1 // pred_check
      _
    $region27: #{dqn_forward.1} parent=1 // pred_check_branch
      %49 = sbr.rel (0) target = $region29
    $region28: #{dqn_forward.1} parent=1 // pred_region
      _
    $region29: #{dqn_forward.1} parent=1 // pred_fallthru
      _
    // Predicated region
    $region30: #{dqn_forward.1} parent=1 // pred_check
      _
    $region31: #{dqn_forward.1} parent=1 // pred_check_branch
      %51 = sbr.rel (0) target = $region33
    $region32: #{dqn_forward.1} parent=1 // pred_region
      %53 = dma.done [#allocation3], 2048
    $region33: #{dqn_forward.1} parent=1 // pred_fallthru
      _
    // Predicated region
    $region34: #{dqn_forward.1} parent=1 // pred_check
      _
    $region35: #{dqn_forward.1} parent=1 // pred_check_branch
      %55 = sbr.rel (0) target = $region37
    $region36: #{dqn_forward.1} parent=1 // pred_region
      %57 = dma.done [#allocation5], 2048
    $region37: #{dqn_forward.1} parent=1 // pred_fallthru
      _
    %v58 = vld [vmem:[%s0] sm:$0xff]
    %v59 = vld [vmem:[%s2] sm:$0x1]
    %v60 = vld [vmem:[%s1] sm:$0x1]
    %62 = vset.pattern.permute.xlu0 0
    %63 = vperm.xlu0 %62, %v58
    %v64 = vpop.permute.xlu0 %63
    %v66 = vperm.slane %v60, 0
    %v67 = vmul.f32 %v64, %v66
    %v69 = vperm.slane %v59, 0
    %v71 = vadd.f32 %v69, %v67
    %v72 = vld [vmem:[%s1 + $0x1] sm:$0x1]
    %73 = vset.pattern.permute.xlu0 1
    %74 = vperm.xlu0 %73, %v58
    %v75 = vpop.permute.xlu0 %74
    %v77 = vperm.slane %v72, 0
    %v78 = vmul.f32 %v75, %v77
    %v79 = vadd.f32 %v71, %v78
    %v80 = vld [vmem:[%s1 + $0x2] sm:$0x1]
    %81 = vset.pattern.permute.xlu0 2
    %82 = vperm.xlu0 %81, %v58
    %v83 = vpop.permute.xlu0 %82
    %v85 = vperm.slane %v80, 0
    %v86 = vmul.f32 %v83, %v85
    %v87 = vadd.f32 %v79, %v86
    %v88 = vld [vmem:[%s1 + $0x3] sm:$0x1]
    %89 = vset.pattern.permute.xlu0 3
    %90 = vperm.xlu0 %89, %v58
    %v91 = vpop.permute.xlu0 %90
    %v93 = vperm.slane %v88, 0
    %v94 = vmul.f32 %v91, %v93
    %v95 = vadd.f32 %v87, %v94
    %v96 = vmax.f32 %v95, 0.0
    %v97 = vpack.c.bf16 %v96, %v96
    %v98 = vld [vmem:[#allocation2] sm:$0xff]
    %v99 = vld [vmem:[#allocation2 + $0x8] sm:$0xff]
    %v100 = vld [vmem:[#allocation2 + $0x10] sm:$0xff]
    %v101 = vld [vmem:[#allocation2 + $0x18] sm:$0xff]
    %v102 = vld [vmem:[#allocation2 + $0x20] sm:$0xff]
    %v103 = vld [vmem:[#allocation2 + $0x28] sm:$0xff]
    %v104 = vld [vmem:[#allocation2 + $0x30] sm:$0xff]
    %v105 = vld [vmem:[#allocation2 + $0x38] sm:$0xff]
    %v106 = vld [vmem:[#allocation2 + $0x40] sm:$0xff]
    %v107 = vld [vmem:[#allocation2 + $0x48] sm:$0xff]
    %v108 = vld [vmem:[#allocation2 + $0x50] sm:$0xff]
    %v109 = vld [vmem:[#allocation2 + $0x58] sm:$0xff]
    %v110 = vld [vmem:[#allocation2 + $0x60] sm:$0xff]
    %v111 = vld [vmem:[#allocation2 + $0x68] sm:$0xff]
    %v112 = vld [vmem:[#allocation2 + $0x70] sm:$0xff]
    %v113 = vld [vmem:[#allocation2 + $0x78] sm:$0xff]
    %v114 = vld [vmem:[%s4] sm:$0x3]
    %v116 = vperm.slane %v114, 0
    %v117 = vperm.slane %v114, 1
    %v136 = vunpack.c.l.b16 %v98
    %v137 = vunpack.c.h.b16 %v98
    %v138 = vunpack.c.l.b16 %v99
    %v139 = vunpack.c.h.b16 %v99
    %v140 = vunpack.c.l.b16 %v100
    %v141 = vunpack.c.h.b16 %v100
    %v142 = vunpack.c.l.b16 %v101
    %v143 = vunpack.c.h.b16 %v101
    %v144 = vunpack.c.l.b16 %v102
    %v145 = vunpack.c.h.b16 %v102
    %v146 = vunpack.c.l.b16 %v103
    %v147 = vunpack.c.h.b16 %v103
    %v148 = vunpack.c.l.b16 %v104
    %v149 = vunpack.c.h.b16 %v104
    %v150 = vunpack.c.l.b16 %v105
    %v151 = vunpack.c.h.b16 %v105
    %v152 = vunpack.c.l.b16 %v106
    %v153 = vunpack.c.h.b16 %v106
    %v154 = vunpack.c.l.b16 %v107
    %v155 = vunpack.c.h.b16 %v107
    %v156 = vunpack.c.l.b16 %v108
    %v157 = vunpack.c.h.b16 %v108
    %v158 = vunpack.c.l.b16 %v109
    %v159 = vunpack.c.h.b16 %v109
    %v160 = vunpack.c.l.b16 %v110
    %v161 = vunpack.c.h.b16 %v110
    %v162 = vunpack.c.l.b16 %v111
    %v163 = vunpack.c.h.b16 %v111
    %v164 = vunpack.c.l.b16 %v112
    %v165 = vunpack.c.h.b16 %v112
    %v166 = vunpack.c.l.b16 %v113
    %v167 = vunpack.c.h.b16 %v113
    %v168 = vpack.c.b16 %v138, %v136
    %v169 = vpack.c.b16 %v139, %v137
    %v170 = vpack.c.b16 %v142, %v140
    %v171 = vpack.c.b16 %v143, %v141
    %v172 = vpack.c.b16 %v146, %v144
    %v173 = vpack.c.b16 %v147, %v145
    %v174 = vpack.c.b16 %v150, %v148
    %v175 = vpack.c.b16 %v151, %v149
    %v176 = vpack.c.b16 %v154, %v152
    %v177 = vpack.c.b16 %v155, %v153
    %v178 = vpack.c.b16 %v158, %v156
    %v179 = vpack.c.b16 %v159, %v157
    %v180 = vpack.c.b16 %v162, %v160
    %v181 = vpack.c.b16 %v163, %v161
    %v182 = vpack.c.b16 %v166, %v164
    %v183 = vpack.c.b16 %v167, %v165
    %200 = vmatpush.bf16.msra.mxu0 %v182
    %201 = vmatpush.bf16.msra.mxu0 %v180
    %202 = vmatpush.bf16.msra.mxu0 %v178
    %203 = vmatpush.bf16.msra.mxu0 %v176
    %204 = vmatpush.bf16.msra.mxu0 %v174
    %205 = vmatpush.bf16.msra.mxu0 %v172
    %206 = vmatpush.bf16.msra.mxu0 %v170
    %207 = vmatpush.bf16.msra.mxu0 %v168
    %208 = vmatmul.bf16.gmra.mxu0 %v97
    %v209 = vpop.f32.mrf.mxu0
    %v210 = vadd.f32 %v116, %v209
    %v211 = vpop.f32.mrf.mxu0
    %212 = vdwg.mxu0
    %213 = vmatpush.bf16.msra.mxu0 %v183
    %214 = vmatpush.bf16.msra.mxu0 %v181
    %215 = vmatpush.bf16.msra.mxu0 %v179
    %216 = vmatpush.bf16.msra.mxu0 %v177
    %217 = vmatpush.bf16.msra.mxu0 %v175
    %218 = vmatpush.bf16.msra.mxu0 %v173
    %219 = vmatpush.bf16.msra.mxu0 %v171
    %220 = vmatpush.bf16.msra.mxu0 %v169
    %221 = vmatmul.bf16.gmra.mxu0 %v97
    %v222 = vpop.f32.mrf.mxu0
    %v223 = vadd.f32 %v117, %v222
    %v224 = vpop.f32.mrf.mxu0
    %225 = vdwg.mxu0
    %v226 = vmax.f32 %v210, 0.0
    %v227 = vmax.f32 %v223, 0.0
    %v228 = vpack.c.bf16 %v226, %v226
    %v229 = vpack.c.bf16 %v227, %v227
    %v230 = vld [vmem:[#allocation4] sm:$0xf]
    %v231 = vld [vmem:[#allocation4 + $0x4] sm:$0xf]
    %v232 = vld [vmem:[#allocation4 + $0x8] sm:$0xf]
    %v233 = vld [vmem:[#allocation4 + $0xc] sm:$0xf]
    %v234 = vld [vmem:[#allocation4 + $0x10] sm:$0xf]
    %v235 = vld [vmem:[#allocation4 + $0x14] sm:$0xf]
    %v236 = vld [vmem:[#allocation4 + $0x18] sm:$0xf]
    %v237 = vld [vmem:[#allocation4 + $0x1c] sm:$0xf]
    %v238 = vld [vmem:[#allocation4 + $0x20] sm:$0xf]
    %v239 = vld [vmem:[#allocation4 + $0x24] sm:$0xf]
    %v240 = vld [vmem:[#allocation4 + $0x28] sm:$0xf]
    %v241 = vld [vmem:[#allocation4 + $0x2c] sm:$0xf]
    %v242 = vld [vmem:[#allocation4 + $0x30] sm:$0xf]
    %v243 = vld [vmem:[#allocation4 + $0x34] sm:$0xf]
    %v244 = vld [vmem:[#allocation4 + $0x38] sm:$0xf]
    %v245 = vld [vmem:[#allocation4 + $0x3c] sm:$0xf]
    %v246 = vld [vmem:[#allocation4 + $0x40] sm:$0xf]
    %v247 = vld [vmem:[#allocation4 + $0x44] sm:$0xf]
    %v248 = vld [vmem:[#allocation4 + $0x48] sm:$0xf]
    %v249 = vld [vmem:[#allocation4 + $0x4c] sm:$0xf]
    %v250 = vld [vmem:[#allocation4 + $0x50] sm:$0xf]
    %v251 = vld [vmem:[#allocation4 + $0x54] sm:$0xf]
    %v252 = vld [vmem:[#allocation4 + $0x58] sm:$0xf]
    %v253 = vld [vmem:[#allocation4 + $0x5c] sm:$0xf]
    %v254 = vld [vmem:[#allocation4 + $0x60] sm:$0xf]
    %v255 = vld [vmem:[#allocation4 + $0x64] sm:$0xf]
    %v256 = vld [vmem:[#allocation4 + $0x68] sm:$0xf]
    %v257 = vld [vmem:[#allocation4 + $0x6c] sm:$0xf]
    %v258 = vld [vmem:[#allocation4 + $0x70] sm:$0xf]
    %v259 = vld [vmem:[#allocation4 + $0x74] sm:$0xf]
    %v260 = vld [vmem:[#allocation4 + $0x78] sm:$0xf]
    %v261 = vld [vmem:[#allocation4 + $0x7c] sm:$0xf]
    %v294 = vunpack.c.l.b16 %v230
    %v295 = vunpack.c.l.b16 %v231
    %v296 = vunpack.c.l.b16 %v232
    %v297 = vunpack.c.l.b16 %v233
    %v298 = vunpack.c.l.b16 %v234
    %v299 = vunpack.c.l.b16 %v235
    %v300 = vunpack.c.l.b16 %v236
    %v301 = vunpack.c.l.b16 %v237
    %v302 = vunpack.c.l.b16 %v238
    %v303 = vunpack.c.l.b16 %v239
    %v304 = vunpack.c.l.b16 %v240
    %v305 = vunpack.c.l.b16 %v241
    %v306 = vunpack.c.l.b16 %v242
    %v307 = vunpack.c.l.b16 %v243
    %v308 = vunpack.c.l.b16 %v244
    %v309 = vunpack.c.l.b16 %v245
    %v310 = vunpack.c.l.b16 %v246
    %v311 = vunpack.c.l.b16 %v247
    %v312 = vunpack.c.l.b16 %v248
    %v313 = vunpack.c.l.b16 %v249
    %v314 = vunpack.c.l.b16 %v250
    %v315 = vunpack.c.l.b16 %v251
    %v316 = vunpack.c.l.b16 %v252
    %v317 = vunpack.c.l.b16 %v253
    %v318 = vunpack.c.l.b16 %v254
    %v319 = vunpack.c.l.b16 %v255
    %v320 = vunpack.c.l.b16 %v256
    %v321 = vunpack.c.l.b16 %v257
    %v322 = vunpack.c.l.b16 %v258
    %v323 = vunpack.c.l.b16 %v259
    %v324 = vunpack.c.l.b16 %v260
    %v325 = vunpack.c.l.b16 %v261
    %v326 = vpack.c.b16 %v295, %v294
    %v327 = vpack.c.b16 %v297, %v296
    %v328 = vpack.c.b16 %v299, %v298
    %v329 = vpack.c.b16 %v301, %v300
    %v330 = vpack.c.b16 %v303, %v302
    %v331 = vpack.c.b16 %v305, %v304
    %v332 = vpack.c.b16 %v307, %v306
    %v333 = vpack.c.b16 %v309, %v308
    %v334 = vpack.c.b16 %v311, %v310
    %v335 = vpack.c.b16 %v313, %v312
    %v336 = vpack.c.b16 %v315, %v314
    %v337 = vpack.c.b16 %v317, %v316
    %v338 = vpack.c.b16 %v319, %v318
    %v339 = vpack.c.b16 %v321, %v320
    %v340 = vpack.c.b16 %v323, %v322
    %v341 = vpack.c.b16 %v325, %v324
    %358 = vmatpush.bf16.msra.mxu0 %v333
    %359 = vmatpush.bf16.msra.mxu0 %v332
    %360 = vmatpush.bf16.msra.mxu0 %v331
    %361 = vmatpush.bf16.msra.mxu0 %v330
    %362 = vmatpush.bf16.msra.mxu0 %v329
    %363 = vmatpush.bf16.msra.mxu0 %v328
    %364 = vmatpush.bf16.msra.mxu0 %v327
    %365 = vmatpush.bf16.msra.mxu0 %v326
    %366 = vmatmul.bf16.gmra.mxu0 %v228
    %v367 = vpop.f32.mrf.mxu0
    %v368 = vadd.f32 0.0, %v367
    %v369 = vpop.f32.mrf.mxu0
    %370 = vdwg.mxu0
    %371 = vmatpush.bf16.msra.mxu0 %v341
    %372 = vmatpush.bf16.msra.mxu0 %v340
    %373 = vmatpush.bf16.msra.mxu0 %v339
    %374 = vmatpush.bf16.msra.mxu0 %v338
    %375 = vmatpush.bf16.msra.mxu0 %v337
    %376 = vmatpush.bf16.msra.mxu0 %v336
    %377 = vmatpush.bf16.msra.mxu0 %v335
    %378 = vmatpush.bf16.msra.mxu0 %v334
    %379 = vmatmul.bf16.gmra.mxu0 %v229
    %v380 = vpop.f32.mrf.mxu0
    %v381 = vadd.f32 %v368, %v380
    %v382 = vpop.f32.mrf.mxu0
    %383 = vdwg.mxu0
    %v384 = vld [vmem:[%s6] sm:$0x1]
    %v386 = vperm.slane %v384, 0
    %v388 = vadd.f32 %v381, %v386
    %vm389 = vcmask 15360
    %390 = vst.msk [vmem:[%s7] sm:$0xff] %vm389, %v388
    // Predicated region
    $region38: #{dqn_forward.1} parent=1 // pred_check
      _
    $region39: #{dqn_forward.1} parent=1 // pred_check_branch
      %392 = sbr.rel (0) target = $region41
    $region40: #{dqn_forward.1} parent=1 // pred_region
      _
    $region41: #{dqn_forward.1} parent=1 // pred_fallthru
      _
    // Predicated region
    $region42: #{dqn_forward.1} parent=1 // pred_check
      _
    $region43: #{dqn_forward.1} parent=1 // pred_check_branch
      %394 = sbr.rel (0) target = $region45
    $region44: #{dqn_forward.1} parent=1 // pred_region
      _
    $region45: #{dqn_forward.1} parent=1 // pred_fallthru
      _
    %395 = vsyncpa [#allocation3], 1
    %396 = vsyncpa [#allocation5], 1

</llo_original>
